<compile_context>
chip_gen: v5e
topology: v5e:2x2
jax: 0.10.0
libtpu: 0.0.40
codegen_flags: <defaults>
</compile_context>

<pallas_src>
import jax
import jax.numpy as jnp
from jax.experimental import pallas as pl
from jax.experimental.pallas import tpu as pltpu


def _round_up(x: int, m: int) -> int:
    return (x + m - 1) // m * m


def _lora_linear_kernel(x_ref, w_ref, xa_ref, b_ref, o_ref, acc_ref):
    # x_ref : (tm, tk)    w_ref : (tk, tn)
    # xa_ref: (tm, r)     b_ref : (r,  tn)   (scaling already folded into B)
    # o_ref : (tm, tn)    acc_ref: (tm, tn) f32 scratch
    k = pl.program_id(2)
    nk = pl.num_programs(2)

    partial_acc = jnp.dot(x_ref[...], w_ref[...],
                          preferred_element_type=jnp.float32)

    @pl.when(k == 0)
    def _():
        # Direct write of the first partial product: no zero-init round trip.
        acc_ref[...] = partial_acc

    @pl.when(k > 0)
    def _():
        acc_ref[...] += partial_acc

    @pl.when(k == nk - 1)
    def _():
        lora = jnp.dot(xa_ref[...], b_ref[...],
                       preferred_element_type=jnp.float32)
        o_ref[...] = (acc_ref[...] + lora).astype(o_ref.dtype)


def prepare_lora_weights(w_base, lora_a, lora_b, scaling, *,
                         tn: int = 512, tk: int = 1024, compute_dtype=None):
    """One-time (per parameter set) weight prep.

    Transposes to lane-dense layouts, folds `scaling` into B, pads K/N to tile
    multiples and optionally casts to `compute_dtype` (e.g. jnp.bfloat16).
    Call once and reuse the result for every forward pass.
    """
    N, K = w_base.shape                 # out_features, in_features
    r = lora_a.shape[0]

    tn_eff = min(tn, _round_up(N, 128))
    tk_eff = min(tk, _round_up(K, 128))
    N_pad = _round_up(N, tn_eff)
    K_pad = _round_up(K, tk_eff)

    w_t = jnp.transpose(w_base)                       # (K, N)
    a_t = jnp.transpose(lora_a)                       # (K, r)  (wrapper-only)
    b_t = jnp.transpose(lora_b) * float(scaling)      # (r, N), scaling folded in

    if compute_dtype is not None:
        w_t = w_t.astype(compute_dtype)
        a_t = a_t.astype(compute_dtype)
        b_t = b_t.astype(compute_dtype)

    if (K_pad, N_pad) != (K, N):
        w_t = jnp.pad(w_t, ((0, K_pad - K), (0, N_pad - N)))
    if N_pad != N:
        b_t = jnp.pad(b_t, ((0, 0), (0, N_pad - N)))

    return dict(w_t=w_t, a_t=a_t, b_t=b_t,
                in_features=K, out_features=N, r=r,
                K_pad=K_pad, N_pad=N_pad, tk_eff=tk_eff, tn_eff=tn_eff,
                compute_dtype=compute_dtype)


def lora_linear(x, params, *, tm: int = 512, vmem_limit_bytes=None):
    """x: (..., in_features) -> (..., out_features)."""
    K = params["in_features"]
    N = params["out_features"]
    r = params["r"]
    K_pad, N_pad = params["K_pad"], params["N_pad"]
    tk_eff, tn_eff = params["tk_eff"], params["tn_eff"]
    compute_dtype = params["compute_dtype"]

    orig_shape = x.shape
    result_dtype = x.dtype
    x2d = x.reshape(-1, K)
    if compute_dtype is not None:
        x2d = x2d.astype(compute_dtype)
    M = x2d.shape[0]

    tm_eff = min(tm, _round_up(M, 16))
    M_pad = _round_up(M, tm_eff)

    # LoRA down-projection: tiny (M, K) x (K, r) matmul done once here so the
    # kernel has no j==0 cache dependency, A is never streamed by the pipeline,
    # and both M and N grid axes can be megacore-parallel.
    xa = jnp.dot(x2d, params["a_t"])                  # (M, r)

    if M_pad != M or K_pad != K:
        x2d = jnp.pad(x2d, ((0, M_pad - M), (0, K_pad - K)))
    if M_pad != M:
        xa = jnp.pad(xa, ((0, M_pad - M), (0, 0)))

    grid = (M_pad // tm_eff, N_pad // tn_eff, K_pad // tk_eff)

    out = pl.pallas_call(
        _lora_linear_kernel,
        out_shape=jax.ShapeDtypeStruct((M_pad, N_pad), result_dtype),
        grid_spec=pltpu.PrefetchScalarGridSpec(
            num_scalar_prefetch=0,
            grid=grid,
            in_specs=[
                pl.BlockSpec((tm_eff, tk_eff), lambda i, j, k: (i, k)),   # x
                pl.BlockSpec((tk_eff, tn_eff), lambda i, j, k: (k, j)),   # W^T
                pl.BlockSpec((tm_eff, r),      lambda i, j, k: (i, 0)),   # xa
                pl.BlockSpec((r, tn_eff),      lambda i, j, k: (0, j)),   # scaled B^T
            ],
            out_specs=pl.BlockSpec((tm_eff, tn_eff), lambda i, j, k: (i, j)),
            scratch_shapes=[pltpu.VMEM((tm_eff, tn_eff), jnp.float32)],   # f32 acc
        ),
        compiler_params=pltpu.CompilerParams(
            # xa is precomputed, so M and N are independent -> both "parallel"
            # (v7x megacore shards over them); K is the sequential reduction.
            dimension_semantics=("parallel", "parallel", "arbitrary"),
            vmem_limit_bytes=vmem_limit_bytes,
        ),
    )(x2d, params["w_t"], xa, params["b_t"])

    out = out[:M, :N]
    return out.reshape(*orig_shape[:-1], N)


if __name__ == "__main__":
    # Small deterministic setup consistent with the module's __init__:
    #   base_layer = nn.Linear(in_features=32, out_features=64)
    #   r=8, lora_alpha=16 -> scaling = lora_alpha / r = 2.0
    batch, seq = 2, 8
    in_features, out_features, r = 32, 64, 8
    lora_alpha = 16
    scaling = lora_alpha / r

    key = jax.random.PRNGKey(0)
    kx, kw, ka, kb = jax.random.split(key, 4)

    x = jax.random.normal(kx, (batch, seq, in_features), dtype=jnp.float32)
    w_base = jax.random.normal(kw, (out_features, in_features),
                               dtype=jnp.float32) * 0.05
    # kaiming-uniform-ish init for A; B would be zeros per reset_lora_parameters,
    # but we use small nonzero values so the LoRA path is actually exercised.
    lora_a = jax.random.uniform(ka, (r, in_features), dtype=jnp.float32,
                                minval=-0.3, maxval=0.3)
    lora_b = jax.random.normal(kb, (out_features, r), dtype=jnp.float32) * 0.05

    # One-time weight prep (hoisted out of the per-call path), then forward.
    params = prepare_lora_weights(w_base, lora_a, lora_b, scaling)
    out = lora_linear(x, params)
    out = jax.block_until_ready(out)

    # Pure-JAX reference.
    x2d = x.reshape(-1, in_features)
    ref = x2d @ w_base.T + scaling * ((x2d @ lora_a.T) @ lora_b.T)
    ref = ref.reshape(batch, seq, out_features)

    assert out.shape == (batch, seq, out_features)
    assert jnp.allclose(out, ref, atol=1e-3, rtol=1e-3), "mismatch vs reference"
    print("KERNEL_OK")
</pallas_src>

<mosaic_0001>
module attributes {stable_mosaic.version = 11 : i64} {
  func.func @_lora_linear_kernel(%arg0: i32, %arg1: i32, %arg2: i32, %arg3: memref<16x128xf32, #tpu.memory_space<vmem>>, %arg4: memref<128x128xf32, #tpu.memory_space<vmem>>, %arg5: memref<16x8xf32, #tpu.memory_space<vmem>>, %arg6: memref<8x128xf32, #tpu.memory_space<vmem>>, %arg7: memref<16x128xf32, #tpu.memory_space<vmem>>, %arg8: memref<16x128xf32, #tpu.memory_space<vmem>>) attributes {dimension_semantics = [#tpu.dimension_semantics<parallel>, #tpu.dimension_semantics<parallel>, #tpu.dimension_semantics<arbitrary>], iteration_bounds = array<i64: 1, 1, 1>, scalar_prefetch = 0 : i64, scratch_operands = 1 : i64, tpu.core_type = #tpu.core_type<tc>, window_params = [{transform_indices = @transform_0, window_bounds = array<i64: 16, 128>}, {transform_indices = @transform_1, window_bounds = array<i64: 128, 128>}, {transform_indices = @transform_2, window_bounds = array<i64: 16, 8>}, {transform_indices = @transform_3, window_bounds = array<i64: 8, 128>}, {transform_indices = @transform_4, window_bounds = array<i64: 16, 128>}]} {
    %c0 = arith.constant 0 : index
    %c0_0 = arith.constant 0 : index
    %0 = vector.load %arg3[%c0, %c0_0] : memref<16x128xf32, #tpu.memory_space<vmem>>, vector<16x128xf32>
    %c0_1 = arith.constant 0 : index
    %c0_2 = arith.constant 0 : index
    %1 = vector.load %arg4[%c0_1, %c0_2] : memref<128x128xf32, #tpu.memory_space<vmem>>, vector<128x128xf32>
    %cst = arith.constant dense<0.000000e+00> : vector<16x128xf32>
    %2 = tpu.matmul %0, %1, %cst {dimension_numbers = #tpu.dot_dimension_numbers<[1], [0], [0], [1], [0, 0, 1, 1], [], []>} : vector<16x128xf32>, vector<128x128xf32>, vector<16x128xf32> -> vector<16x128xf32>
    %c0_i32 = arith.constant 0 : i32
    %3 = arith.cmpi eq, %arg2, %c0_i32 : i32
    %4 = arith.extui %3 : i1 to i32
    %c0_i32_3 = arith.constant 0 : i32
    %5 = arith.cmpi ne, %4, %c0_i32_3 : i32
    scf.if %5 {
      %c0_8 = arith.constant 0 : index
      %c0_9 = arith.constant 0 : index
      %12 = vector.load %arg8[%c0_8, %c0_9] : memref<16x128xf32, #tpu.memory_space<vmem>>, vector<16x128xf32>
      tpu.vector_store %arg8[%c0_8, %c0_9], %2 {strides = array<i32>} : memref<16x128xf32, #tpu.memory_space<vmem>>, vector<16x128xf32>,
    } else {
    }
    %c0_i32_4 = arith.constant 0 : i32
    %6 = arith.cmpi sgt, %arg2, %c0_i32_4 : i32
    %7 = arith.extui %6 : i1 to i32
    %c0_i32_5 = arith.constant 0 : i32
    %8 = arith.cmpi ne, %7, %c0_i32_5 : i32
    scf.if %8 {
      %c0_8 = arith.constant 0 : index
      %c0_9 = arith.constant 0 : index
      %12 = vector.load %arg8[%c0_8, %c0_9] : memref<16x128xf32, #tpu.memory_space<vmem>>, vector<16x128xf32>
      %13 = arith.addf %12, %2 : vector<16x128xf32>
      %c0_10 = arith.constant 0 : index
      %c0_11 = arith.constant 0 : index
      %14 = vector.load %arg8[%c0_10, %c0_11] : memref<16x128xf32, #tpu.memory_space<vmem>>, vector<16x128xf32>
      tpu.vector_store %arg8[%c0_10, %c0_11], %13 {strides = array<i32>} : memref<16x128xf32, #tpu.memory_space<vmem>>, vector<16x128xf32>,
    } else {
    }
    %c0_i32_6 = arith.constant 0 : i32
    %9 = arith.cmpi eq, %arg2, %c0_i32_6 : i32
    %10 = arith.extui %9 : i1 to i32
    %c0_i32_7 = arith.constant 0 : i32
    %11 = arith.cmpi ne, %10, %c0_i32_7 : i32
    scf.if %11 {
      %c0_8 = arith.constant 0 : index
      %c0_9 = arith.constant 0 : index
      %12 = vector.load %arg5[%c0_8, %c0_9] : memref<16x8xf32, #tpu.memory_space<vmem>>, vector<16x8xf32>
      %c0_10 = arith.constant 0 : index
      %c0_11 = arith.constant 0 : index
      %13 = vector.load %arg6[%c0_10, %c0_11] : memref<8x128xf32, #tpu.memory_space<vmem>>, vector<8x128xf32>
      %cst_12 = arith.constant dense<0.000000e+00> : vector<16x128xf32>
      %14 = tpu.matmul %12, %13, %cst_12 {dimension_numbers = #tpu.dot_dimension_numbers<[1], [0], [0], [1], [0, 0, 1, 1], [], []>} : vector<16x8xf32>, vector<8x128xf32>, vector<16x128xf32> -> vector<16x128xf32>
      %c0_13 = arith.constant 0 : index
      %c0_14 = arith.constant 0 : index
      %15 = vector.load %arg8[%c0_13, %c0_14] : memref<16x128xf32, #tpu.memory_space<vmem>>, vector<16x128xf32>
      %16 = arith.addf %15, %14 : vector<16x128xf32>
      %c0_15 = arith.constant 0 : index
      %c0_16 = arith.constant 0 : index
      %17 = vector.load %arg7[%c0_15, %c0_16] : memref<16x128xf32, #tpu.memory_space<vmem>>, vector<16x128xf32>
      tpu.vector_store %arg7[%c0_15, %c0_16], %16 {strides = array<i32>} : memref<16x128xf32, #tpu.memory_space<vmem>>, vector<16x128xf32>,
    } else {
    }
    return
  }
  func.func @transform_0(%arg0: i32, %arg1: i32, %arg2: i32) -> (i32, i32) {
    %c0_i32 = arith.constant 0 : i32
    return %arg0, %arg2 : i32, i32
  }
  func.func @transform_1(%arg0: i32, %arg1: i32, %arg2: i32) -> (i32, i32) {
    %c0_i32 = arith.constant 0 : i32
    return %arg2, %arg1 : i32, i32
  }
  func.func @transform_2(%arg0: i32, %arg1: i32, %arg2: i32) -> (i32, i32) {
    %c0_i32 = arith.constant 0 : i32
    %c0_i32_0 = arith.constant 0 : i32
    return %arg0, %c0_i32 : i32, i32
  }
  func.func @transform_3(%arg0: i32, %arg1: i32, %arg2: i32) -> (i32, i32) {
    %c0_i32 = arith.constant 0 : i32
    %c0_i32_0 = arith.constant 0 : i32
    return %c0_i32, %arg1 : i32, i32
  }
  func.func @transform_4(%arg0: i32, %arg1: i32, %arg2: i32) -> (i32, i32) {
    %c0_i32 = arith.constant 0 : i32
    return %arg0, %arg1 : i32, i32
  }
}

</mosaic_0001>

<llo_original>
// kernel: tpu_custom_call.1
$region0: #{tpu_custom_call.1}
  #allocation0 [shape = 'u32[]', space=smem, size = 0x4, offset = 0x4, fixed_abs, tag = 'smem constant byte address 0x4 - core index']
  #allocation1 [shape = 'u32[72,128]{1,0:T(1,128)}', space=vmem, size = 0x9000, scoped, tag = 'internal scratch']
  #allocation2 [shape = 'f32[16,128]{1,0:T(8,128)}', space=vmem, size = 0x2000, scoped, tag = 'scratch operand']
  %s0 = inlined_call_operand.vmem [shape: f32[16,128], index: 0, kind: input, shape index: {}]
  %s1 = inlined_call_operand.hbm [shape: f32[128,128], index: 1, kind: input, shape index: {}]
  %s2 = inlined_call_operand.vmem [shape: f32[16,8], index: 2, kind: input, shape index: {}]
  %s3 = inlined_call_operand.vmem [shape: f32[8,128], index: 3, kind: input, shape index: {}]
  %s4 = inlined_call_operand.hbm [shape: f32[16,128], index: 4, kind: output, shape index: {}]
  %s5 = sld [smem:[#allocation0]]
  $region42: #{tpu_custom_call.1} parent=0
    _
  %s7 = ssub.s32 1, %s5
  %s8 = scalar_select 0, %s7, %s5
  $region1: #{tpu_custom_call.1} parent=0
    #allocation3 [shape = 'u8[65536]{0}', space=vmem, size = 0x10000, scoped, tag = 'input window, operand 1, single buffered']
    #allocation4 [shape = 's32[1]{0}', space=sflag, size = 0x4, scoped, tag = 'scoped memory for tpu_custom_call.1']
    #allocation5 [shape = 's32[1]{0}', space=sflag, size = 0x4, scoped, tag = 'scoped memory for tpu_custom_call.1']
    #allocation6 [shape = 'u8[8192]{0}', space=vmem, size = 0x2000, scoped, tag = 'output window, operand 0, single buffered']
    %9 = vsyncpa [#allocation4], 0
    %10 = vsyncpa [#allocation5], 0
    // Predicated region
    $region2: #{tpu_custom_call.1} parent=1 // pred_check
      _
    $region3: #{tpu_custom_call.1} parent=1 // pred_check_branch
      %12 = sbr.rel (0) target = $region5
    $region4: #{tpu_custom_call.1} parent=1 // pred_region
      _
    $region5: #{tpu_custom_call.1} parent=1 // pred_fallthru
      _
    // Predicated region
    $region6: #{tpu_custom_call.1} parent=1 // pred_check
      _
    $region7: #{tpu_custom_call.1} parent=1 // pred_check_branch
      %14 = sbr.rel (0) target = $region9
    $region8: #{tpu_custom_call.1} parent=1 // pred_region
      %16 = vsyncadd [#allocation4], 0
      %s17 = sshll.u32 %s1, 4
      %s18 = int_to_ptr.hbm [resolvable:$true] %s17
      %s19 = sshll.u32 [#allocation3], 4
      %s20 = int_to_ptr.vmem [resolvable:$true] %s19
      %25 = dma.hbm_to_vmem [thread:$0]  %s18, 2048, %s20, [#allocation4], 128, 128, 8
    $region9: #{tpu_custom_call.1} parent=1 // pred_fallthru
      _
    // Predicated region
    $region10: #{tpu_custom_call.1} parent=1 // pred_check
      _
    $region11: #{tpu_custom_call.1} parent=1 // pred_check_branch
      %27 = sbr.rel (0) target = $region13
    $region12: #{tpu_custom_call.1} parent=1 // pred_region
      _
    $region13: #{tpu_custom_call.1} parent=1 // pred_fallthru
      _
    // Predicated region
    $region14: #{tpu_custom_call.1} parent=1 // pred_check
      _
    $region15: #{tpu_custom_call.1} parent=1 // pred_check_branch
      %29 = sbr.rel (0) target = $region17
    $region16: #{tpu_custom_call.1} parent=1 // pred_region
      _
    $region17: #{tpu_custom_call.1} parent=1 // pred_fallthru
      _
    // Predicated region
    $region18: #{tpu_custom_call.1} parent=1 // pred_check
      _
    $region19: #{tpu_custom_call.1} parent=1 // pred_check_branch
      %31 = sbr.rel (0) target = $region21
    $region20: #{tpu_custom_call.1} parent=1 // pred_region
      %33 = dma.done [#allocation4], 2048
    $region21: #{tpu_custom_call.1} parent=1 // pred_fallthru
      _
    %v34 = vld [vmem:[%s0] sm:$0xff]
    %v35 = vld [vmem:[%s0 + $0x8] sm:$0xff]
    %v36 = vld [vmem:[#allocation3] sm:$0xff]
    %v37 = vld [vmem:[#allocation3 + $0x8] sm:$0xff]
    %v38 = vld [vmem:[#allocation3 + $0x10] sm:$0xff]
    %v39 = vld [vmem:[#allocation3 + $0x18] sm:$0xff]
    %v40 = vld [vmem:[#allocation3 + $0x20] sm:$0xff]
    %v41 = vld [vmem:[#allocation3 + $0x28] sm:$0xff]
    %v42 = vld [vmem:[#allocation3 + $0x30] sm:$0xff]
    %v43 = vld [vmem:[#allocation3 + $0x38] sm:$0xff]
    %v44 = vld [vmem:[#allocation3 + $0x40] sm:$0xff]
    %v45 = vld [vmem:[#allocation3 + $0x48] sm:$0xff]
    %v46 = vld [vmem:[#allocation3 + $0x50] sm:$0xff]
    %v47 = vld [vmem:[#allocation3 + $0x58] sm:$0xff]
    %v48 = vld [vmem:[#allocation3 + $0x60] sm:$0xff]
    %v49 = vld [vmem:[#allocation3 + $0x68] sm:$0xff]
    %v50 = vld [vmem:[#allocation3 + $0x70] sm:$0xff]
    %v51 = vld [vmem:[#allocation3 + $0x78] sm:$0xff]
    %52 = vmatpush.msra.mxu0 %v51
    %53 = vmatpush.msra.mxu0 %v50
    %54 = vmatpush.msra.mxu0 %v49
    %55 = vmatpush.msra.mxu0 %v48
    %56 = vmatpush.msra.mxu0 %v47
    %57 = vmatpush.msra.mxu0 %v46
    %58 = vmatpush.msra.mxu0 %v45
    %59 = vmatpush.msra.mxu0 %v44
    %60 = vmatpush.msra.mxu0 %v43
    %61 = vmatpush.msra.mxu0 %v42
    %62 = vmatpush.msra.mxu0 %v41
    %63 = vmatpush.msra.mxu0 %v40
    %64 = vmatpush.msra.mxu0 %v39
    %65 = vmatpush.msra.mxu0 %v38
    %66 = vmatpush.msra.mxu0 %v37
    %67 = vmatpush.msra.mxu0 %v36
    %68 = vmatmul.f32.gmra.mxu0 %v34
    %v69 = vpop.f32.mrf.mxu0
    %v70 = vadd.f32 0.0, %v69
    %71 = vmatmul.f32.gmra.mxu0 %v35
    %v72 = vpop.f32.mrf.mxu0
    %v73 = vadd.f32 0.0, %v72
    %74 = vdwg.mxu0
    %p75 = scmp.eq.s32.totalorder 0, 0
    // Predicated region
    $region22: #{tpu_custom_call.1} parent=1 // pred_check
      %p76 = pneg %p75
    $region23: #{tpu_custom_call.1} parent=1 // pred_check_branch
      %78 = sbr.rel (%p76) target = $region25
    $region24: #{tpu_custom_call.1} parent=1 // pred_region
      %79 = vst [vmem:[#allocation2] sm:$0xff] %v70
      %80 = vst [vmem:[#allocation2 + $0x8] sm:$0xff] %v73
    $region25: #{tpu_custom_call.1} parent=1 // pred_fallthru
      _
    %p81 = scmp.gt.s32.totalorder 0, 0
    // Predicated region
    $region26: #{tpu_custom_call.1} parent=1 // pred_check
      %p82 = pneg %p81
    $region27: #{tpu_custom_call.1} parent=1 // pred_check_branch
      %84 = sbr.rel (%p82) target = $region29
    $region28: #{tpu_custom_call.1} parent=1 // pred_region
      %v85 = vld [vmem:[#allocation2] sm:$0xff]
      %v86 = vld [vmem:[#allocation2 + $0x8] sm:$0xff]
      %v87 = vadd.f32 %v85, %v70
      %v88 = vadd.f32 %v86, %v73
      %89 = vst [vmem:[#allocation2] sm:$0xff] %v87
      %90 = vst [vmem:[#allocation2 + $0x8] sm:$0xff] %v88
    $region29: #{tpu_custom_call.1} parent=1 // pred_fallthru
      _
    // Predicated region
    $region30: #{tpu_custom_call.1} parent=1 // pred_check
      %p91 = pneg %p75
    $region31: #{tpu_custom_call.1} parent=1 // pred_check_branch
      %93 = sbr.rel (%p91) target = $region33
    $region32: #{tpu_custom_call.1} parent=1 // pred_region
      %v94 = vld [vmem:[%s2] sm:$0xff]
      %v95 = vld [vmem:[%s2 + $0x8] sm:$0xff]
      %v96 = vld [vmem:[%s3] sm:$0xff]
      %vm97 = vcmask 64512
      %v99 = vsel %vm97, %v94, 0
      %v102 = vsel %vm97, %v95, 0
      %104 = vmatpush.msra.mxu0 0.0
      %105 = vmatpush.msra.mxu0 0.0
      %106 = vmatpush.msra.mxu0 0.0
      %107 = vmatpush.msra.mxu0 0.0
      %108 = vmatpush.msra.mxu0 0.0
      %109 = vmatpush.msra.mxu0 0.0
      %110 = vmatpush.msra.mxu0 0.0
      %111 = vmatpush.msra.mxu0 0.0
      %112 = vmatpush.msra.mxu0 0.0
      %113 = vmatpush.msra.mxu0 0.0
      %114 = vmatpush.msra.mxu0 0.0
      %115 = vmatpush.msra.mxu0 0.0
      %116 = vmatpush.msra.mxu0 0.0
      %117 = vmatpush.msra.mxu0 0.0
      %118 = vmatpush.msra.mxu0 0.0
      %119 = vmatpush.msra.mxu0 %v96
      %120 = vmatmul.f32.gmra.mxu0 %v99
      %v121 = vpop.f32.mrf.mxu0
      %v122 = vadd.f32 0.0, %v121
      %123 = vmatmul.f32.gmra.mxu0 %v102
      %v124 = vpop.f32.mrf.mxu0
      %v125 = vadd.f32 0.0, %v124
      %126 = vdwg.mxu0
      %v127 = vld [vmem:[#allocation2] sm:$0xff]
      %v128 = vld [vmem:[#allocation2 + $0x8] sm:$0xff]
      %v129 = vadd.f32 %v127, %v122
      %v130 = vadd.f32 %v128, %v125
      %131 = vst [vmem:[#allocation6] sm:$0xff] %v129
      %132 = vst [vmem:[#allocation6 + $0x8] sm:$0xff] %v130
    $region33: #{tpu_custom_call.1} parent=1 // pred_fallthru
      _
    // Predicated region
    $region34: #{tpu_custom_call.1} parent=1 // pred_check
      _
    $region35: #{tpu_custom_call.1} parent=1 // pred_check_branch
      %134 = sbr.rel (0) target = $region37
    $region36: #{tpu_custom_call.1} parent=1 // pred_region
      %136 = vsyncadd [#allocation5], 0
      %s137 = sshll.u32 [#allocation6], 4
      %s138 = int_to_ptr.vmem [resolvable:$true] %s137
      %s139 = sshll.u32 %s4, 4
      %s140 = int_to_ptr.hbm [resolvable:$true] %s139
      %145 = dma.vmem_to_hbm [thread:$0]  %s138, 256, %s140, [#allocation5], 128, 128, 8
    $region37: #{tpu_custom_call.1} parent=1 // pred_fallthru
      _
    // Predicated region
    $region38: #{tpu_custom_call.1} parent=1 // pred_check
      _
    $region39: #{tpu_custom_call.1} parent=1 // pred_check_branch
      %147 = sbr.rel (0) target = $region41
    $region40: #{tpu_custom_call.1} parent=1 // pred_region
      %149 = dma.done [#allocation5], 256
    $region41: #{tpu_custom_call.1} parent=1 // pred_fallthru
      _
    %150 = vsyncpa [#allocation4], 1
    %151 = vsyncpa [#allocation5], 1

</llo_original>
